<compile_context>
chip_gen: v5e
topology: v5e:2x2
jax: 0.10.0
libtpu: 0.0.40
codegen_flags: <defaults>
</compile_context>

<pallas_src>
import functools

import jax
import jax.numpy as jnp
from jax.experimental import pallas as pl
from jax.experimental.pallas import tpu as pltpu

LANE = 128          # TPU lane width; feature dims padded to this.
SUB = 8             # sublane group; batch padded to this.
DR_OFF = 64         # lane offset of dr_data inside the packed (B,128) operand.
BIAS_LANE = LANE - 1  # lane carrying the constant 1.0 that feeds the bias row.


def _round_up(x, m):
    return ((x + m - 1) // m) * m


def char_rnn1_kernel(ids_ref, ew_ref, wbig_ref, hd_ref, out_ref, *, vocab_pad):
    """Fused one-hot-gather GRU step + h2h linear, two MXU calls total.

    ids_ref : (BP, 1)        int32 token ids (padded batch rows carry 0)
    ew_ref  : (VP, 384)      pre-multiplied embed @ W_ih (+ b_ih), gate g in
                             lanes [g*128, g*128+H)
    wbig_ref: (128, 512)     rows [0,H)      -> W_hh gates at lanes [0,384)
                             rows [64,64+O)  -> W_h2h     at lanes [384,384+O)
                             row  127        -> b_hh | b_h2h (fed by hd lane 127 == 1)
    hd_ref  : (BP, 128)      h in lanes [0,H), dr_data in lanes [64,64+O),
                             1.0 in lane 127, zeros elsewhere
    out_ref : (BP, 256)      lanes [0,128) = new hidden, lanes [128,256) = h2h(dr)
    """
    bp = hd_ref.shape[0]

    # One-hot MXU gather of the pre-multiplied table -> gx (b_ih already folded in).
    ids = ids_ref[...]                                              # (BP, 1)
    col = jax.lax.broadcasted_iota(jnp.int32, (bp, vocab_pad), 1)   # (BP, VP)
    onehot = (col == ids).astype(jnp.float32)
    gx = jnp.dot(onehot, ew_ref[...], preferred_element_type=jnp.float32)   # (BP, 384)

    # Single fused dot: gh (hidden->gates + b_hh) and h2h(dr) + b_h2h.
    hd = hd_ref[...]                                                # (BP, 128)
    ghz = jnp.dot(hd, wbig_ref[...], preferred_element_type=jnp.float32)    # (BP, 512)
    gh = ghz[:, 0:3 * LANE]

    # PyTorch GRU gate order [reset, update, new]; slices are 128-lane aligned.
    r = jax.nn.sigmoid(gx[:, 0 * LANE:1 * LANE] + gh[:, 0 * LANE:1 * LANE])
    z = jax.nn.sigmoid(gx[:, 1 * LANE:2 * LANE] + gh[:, 1 * LANE:2 * LANE])
    n = jnp.tanh(gx[:, 2 * LANE:3 * LANE] + r * gh[:, 2 * LANE:3 * LANE])
    hnew = (1.0 - z) * n + z * hd   # valid in lanes [0,H); rest sliced off in glue

    out_ref[:, 0:LANE] = hnew
    out_ref[:, LANE:2 * LANE] = ghz[:, 3 * LANE:4 * LANE]   # h2h(dr_data) + b_h2h


def init_params(key, input_size, hidden_size, output_size):
    """Draw PyTorch-equivalent natural-shape weights, then fuse/pre-multiply once."""
    V, H, O = input_size, hidden_size, output_size
    assert H <= DR_OFF, "hidden lanes must not overlap the dr_data lane block"
    assert DR_OFF + O <= BIAS_LANE, "dr_data lanes must not overlap the bias lane"
    VP = _round_up(V, LANE)

    ks = jax.random.split(key, 8)
    k = 1.0 / jnp.sqrt(jnp.float32(H))
    ko = 1.0 / jnp.sqrt(jnp.float32(O))

    # Natural-shape draws mirroring PyTorch initializers (weights pre-transposed
    # to (in, out)).
    embed = jax.random.normal(ks[0], (V, H), jnp.float32)              # Embedding: N(0,1)
    w_ih = jax.random.uniform(ks[1], (3, H, H), jnp.float32, -k, k)    # GRU: U(-1/sqrt(H))
    w_hh = jax.random.uniform(ks[2], (3, H, H), jnp.float32, -k, k)
    b_ih = jax.random.uniform(ks[3], (3, H), jnp.float32, -k, k)
    b_hh = jax.random.uniform(ks[4], (3, H), jnp.float32, -k, k)
    w_h2h = jax.random.uniform(ks[5], (O, O), jnp.float32, -ko, ko)    # Linear(O, O)
    b_h2h = jax.random.uniform(ks[6], (O,), jnp.float32, -ko, ko)
    w_h2o = jax.random.uniform(ks[7], (H, O), jnp.float32, -k, k)      # dead code in forward

    # Pre-multiplied gather table: EW[v, g*128:g*128+H] = embed[v] @ W_ih[g] + b_ih[g].
    ew = jnp.zeros((VP, 3 * LANE), jnp.float32)
    for g in range(3):
        ew = ew.at[:V, g * LANE:g * LANE + H].set(embed @ w_ih[g] + b_ih[g][None, :])

    # Block-stacked weight: W_hh gates, W_h2h, and both biases in one (128, 512).
    w_big = jnp.zeros((LANE, 4 * LANE), jnp.float32)
    for g in range(3):
        w_big = w_big.at[:H, g * LANE:g * LANE + H].set(w_hh[g])
        w_big = w_big.at[BIAS_LANE, g * LANE:g * LANE + H].set(b_hh[g])
    w_big = w_big.at[DR_OFF:DR_OFF + O, 3 * LANE:3 * LANE + O].set(w_h2h)
    w_big = w_big.at[BIAS_LANE, 3 * LANE:3 * LANE + O].set(b_h2h)

    # NOTE: at large H/V store ew / w_big in bfloat16 (f32 accumulate) to halve
    # weight DMA & VMEM residency (matters first on v7x's 64 MiB VMEM); kept f32
    # here to preserve module numerics.  Gate elementwise math stays f32 always
    # (v5e VPU/EUP have no bf16 path).
    return {
        "ew": ew,
        "w_big": w_big,
        # Natural-shape copies kept only for the pure-JAX reference / parity;
        # not used by the kernel.  w_h2o is dead code in the module forward.
        "raw": {"embed": embed, "w_ih": w_ih, "w_hh": w_hh, "b_ih": b_ih,
                "b_hh": b_hh, "w_h2h": w_h2h, "b_h2h": b_h2h, "w_h2o": w_h2o},
    }


@jax.jit
def char_rnn1_forward(params, input_ids, hidden, dr_data):
    """Mirrors CharRNN1.forward(input, hidden, dr_data) for model='gru'."""
    B = input_ids.shape[0]
    H = hidden.shape[-1]
    O = dr_data.shape[-1]
    BP = _round_up(max(B, SUB), SUB)
    VP = params["ew"].shape[0]

    # Glue: build the two dynamic kernel operands (token ids + packed h|dr|1
    # activation).  Weights are pre-fused/pre-padded at init.
    ids = input_ids.reshape(-1).astype(jnp.int32)
    ids_p = jnp.zeros((BP, 1), jnp.int32).at[:B, 0].set(ids)

    hd = jnp.zeros((BP, LANE), jnp.float32)
    hd = hd.at[:B, :H].set(hidden[0].astype(jnp.float32))          # n_layers = 1
    hd = hd.at[:B, DR_OFF:DR_OFF + O].set(dr_data.reshape(B, -1).astype(jnp.float32))
    hd = hd.at[:, BIAS_LANE].set(1.0)                              # feeds the bias row

    vmem = pl.BlockSpec(memory_space=pltpu.MemorySpace.VMEM)

    res = pl.pallas_call(
        functools.partial(char_rnn1_kernel, vocab_pad=VP),
        out_shape=jax.ShapeDtypeStruct((BP, 2 * LANE), jnp.float32),
        in_specs=[vmem, vmem, vmem, vmem],
        out_specs=vmem,
    )(ids_p, params["ew"], params["w_big"], hd)

    # Slice back to the module's natural shapes; hidden returned with the
    # PyTorch layout (n_layers, B, H).  h2o(output) is dead code in the module
    # (immediately overwritten) and intentionally not materialized.
    out = res[:B, LANE:LANE + O]
    hidden_new = res[:B, :H][None, :, :]
    return out, hidden_new


def reference_forward(raw, input_ids, hidden, dr_data):
    """Pure-JAX mirror of the PyTorch forward (single-step GRU + h2h)."""
    x = raw["embed"][input_ids]                          # (B, H)
    h = hidden[0]
    gx = [x @ raw["w_ih"][g] + raw["b_ih"][g] for g in range(3)]
    gh = [h @ raw["w_hh"][g] + raw["b_hh"][g] for g in range(3)]
    r = jax.nn.sigmoid(gx[0] + gh[0])
    z = jax.nn.sigmoid(gx[1] + gh[1])
    n = jnp.tanh(gx[2] + r * gh[2])
    hnew = (1.0 - z) * n + z * h
    out = dr_data @ raw["w_h2h"] + raw["b_h2h"]
    return out, hnew[None, :, :]


if __name__ == "__main__":
    # Shapes implied by the reference script:
    # CharRNN1(alphabet_size=12, hidden=20, output=alphabet_size=12, 'gru', n_layers=1)
    input_size = 12
    hidden_size = 20
    output_size = 12
    n_layers = 1
    batch = 2

    key = jax.random.PRNGKey(0)
    kp, ki0, ki1, kd = jax.random.split(key, 4)

    params = init_params(kp, input_size, hidden_size, output_size)
    hidden_k = jnp.zeros((n_layers, batch, hidden_size), jnp.float32)   # init_hidden
    hidden_r = hidden_k
    dr_data = jax.random.normal(kd, (batch, output_size), jnp.float32)

    # Two steps: the second exercises a non-zero fed-back hidden state.
    for kid in (ki0, ki1):
        input_ids = jax.random.randint(kid, (batch,), 0, input_size)
        out, hidden_k = char_rnn1_forward(params, input_ids, hidden_k, dr_data)
        out_ref, hidden_r = reference_forward(params["raw"], input_ids, hidden_r, dr_data)
        jax.block_until_ready((out, hidden_k))

        assert out.shape == (batch, output_size)
        assert hidden_k.shape == (n_layers, batch, hidden_size)
        assert jnp.allclose(out, out_ref, rtol=1e-3, atol=1e-3), "h2h output mismatch"
        assert jnp.allclose(hidden_k, hidden_r, rtol=1e-3, atol=1e-3), "hidden mismatch"

    print("KERNEL_OK")
</pallas_src>

<mosaic_0001>
module attributes {stable_mosaic.version = 11 : i64} {
  func.func @char_rnn1_kernel(%arg0: memref<8x1xi32, #tpu.memory_space<vmem>>, %arg1: memref<128x384xf32, #tpu.memory_space<vmem>>, %arg2: memref<128x512xf32, #tpu.memory_space<vmem>>, %arg3: memref<8x128xf32, #tpu.memory_space<vmem>>, %arg4: memref<8x256xf32, #tpu.memory_space<vmem>>) attributes {dimension_semantics = [], scalar_prefetch = 0 : i64, scratch_operands = 0 : i64, tpu.core_type = #tpu.core_type<tc>} {
    %c0 = arith.constant 0 : index
    %c0_0 = arith.constant 0 : index
    %0 = vector.load %arg0[%c0, %c0_0] : memref<8x1xi32, #tpu.memory_space<vmem>>, vector<8x1xi32>
    %1 = tpu.iota {dimensions = array<i32: 1>} : vector<8x128xi32>
    %2 = vector.broadcast %0 : vector<8x1xi32> to vector<8x128xi32>
    %3 = arith.cmpi eq, %1, %2 : vector<8x128xi32>
    %4 = arith.extui %3 : vector<8x128xi1> to vector<8x128xi32>
    %5 = arith.sitofp %4 : vector<8x128xi32> to vector<8x128xf32>
    %c0_1 = arith.constant 0 : index
    %c0_2 = arith.constant 0 : index
    %6 = vector.load %arg1[%c0_1, %c0_2] : memref<128x384xf32, #tpu.memory_space<vmem>>, vector<128x384xf32>
    %cst = arith.constant dense<0.000000e+00> : vector<8x384xf32>
    %7 = tpu.matmul %5, %6, %cst {dimension_numbers = #tpu.dot_dimension_numbers<[1], [0], [0], [1], [0, 0, 1, 1], [], []>} : vector<8x128xf32>, vector<128x384xf32>, vector<8x384xf32> -> vector<8x384xf32>
    %c0_3 = arith.constant 0 : index
    %c0_4 = arith.constant 0 : index
    %8 = vector.load %arg3[%c0_3, %c0_4] : memref<8x128xf32, #tpu.memory_space<vmem>>, vector<8x128xf32>
    %c0_5 = arith.constant 0 : index
    %c0_6 = arith.constant 0 : index
    %9 = vector.load %arg2[%c0_5, %c0_6] : memref<128x512xf32, #tpu.memory_space<vmem>>, vector<128x512xf32>
    %cst_7 = arith.constant dense<0.000000e+00> : vector<8x512xf32>
    %10 = tpu.matmul %8, %9, %cst_7 {dimension_numbers = #tpu.dot_dimension_numbers<[1], [0], [0], [1], [0, 0, 1, 1], [], []>} : vector<8x128xf32>, vector<128x512xf32>, vector<8x512xf32> -> vector<8x512xf32>
    %11 = vector.extract_strided_slice %10 {offsets = [0, 0], sizes = [8, 384], strides = [1, 1]} : vector<8x512xf32> to vector<8x384xf32>
    %12 = vector.extract_strided_slice %7 {offsets = [0, 0], sizes = [8, 128], strides = [1, 1]} : vector<8x384xf32> to vector<8x128xf32>
    %13 = vector.extract_strided_slice %11 {offsets = [0, 0], sizes = [8, 128], strides = [1, 1]} : vector<8x384xf32> to vector<8x128xf32>
    %14 = arith.addf %12, %13 : vector<8x128xf32>
    %15 = arith.negf %14 : vector<8x128xf32>
    %16 = math.exp %15 : vector<8x128xf32>
    %cst_8 = arith.constant 1.000000e+00 : f32
    %17 = vector.broadcast %cst_8 : f32 to vector<8x128xf32>
    %18 = arith.addf %17, %16 : vector<8x128xf32>
    %19 = arith.divf %17, %18 : vector<8x128xf32>
    %20 = vector.extract_strided_slice %7 {offsets = [0, 128], sizes = [8, 128], strides = [1, 1]} : vector<8x384xf32> to vector<8x128xf32>
    %21 = vector.extract_strided_slice %11 {offsets = [0, 128], sizes = [8, 128], strides = [1, 1]} : vector<8x384xf32> to vector<8x128xf32>
    %22 = arith.addf %20, %21 : vector<8x128xf32>
    %23 = arith.negf %22 : vector<8x128xf32>
    %24 = math.exp %23 : vector<8x128xf32>
    %cst_9 = arith.constant 1.000000e+00 : f32
    %25 = vector.broadcast %cst_9 : f32 to vector<8x128xf32>
    %26 = arith.addf %25, %24 : vector<8x128xf32>
    %27 = arith.divf %25, %26 : vector<8x128xf32>
    %28 = vector.extract_strided_slice %7 {offsets = [0, 256], sizes = [8, 128], strides = [1, 1]} : vector<8x384xf32> to vector<8x128xf32>
    %29 = vector.extract_strided_slice %11 {offsets = [0, 256], sizes = [8, 128], strides = [1, 1]} : vector<8x384xf32> to vector<8x128xf32>
    %30 = arith.mulf %19, %29 : vector<8x128xf32>
    %31 = arith.addf %28, %30 : vector<8x128xf32>
    %32 = math.tanh %31 : vector<8x128xf32>
    %cst_10 = arith.constant 1.000000e+00 : f32
    %33 = vector.broadcast %cst_10 : f32 to vector<8x128xf32>
    %34 = arith.subf %33, %27 : vector<8x128xf32>
    %35 = arith.mulf %34, %32 : vector<8x128xf32>
    %36 = arith.mulf %27, %8 : vector<8x128xf32>
    %37 = arith.addf %35, %36 : vector<8x128xf32>
    %c0_11 = arith.constant 0 : index
    %c0_12 = arith.constant 0 : index
    %38 = vector.load %arg4[%c0_11, %c0_12] : memref<8x256xf32, #tpu.memory_space<vmem>>, vector<8x128xf32>
    tpu.vector_store %arg4[%c0_11, %c0_12], %37 {strides = array<i32>} : memref<8x256xf32, #tpu.memory_space<vmem>>, vector<8x128xf32>,
    %39 = vector.extract_strided_slice %10 {offsets = [0, 384], sizes = [8, 128], strides = [1, 1]} : vector<8x512xf32> to vector<8x128xf32>
    %c0_13 = arith.constant 0 : index
    %c128 = arith.constant 128 : index
    %40 = vector.load %arg4[%c0_13, %c128] : memref<8x256xf32, #tpu.memory_space<vmem>>, vector<8x128xf32>
    tpu.vector_store %arg4[%c0_13, %c128], %39 {strides = array<i32>} : memref<8x256xf32, #tpu.memory_space<vmem>>, vector<8x128xf32>,
    return
  }
}

</mosaic_0001>

<llo_original>
// kernel: char_rnn1_forward.1
$region0: #{char_rnn1_forward.1}
  #allocation0 [shape = 'u32[]', space=smem, size = 0x4, offset = 0x4, fixed_abs, tag = 'smem constant byte address 0x4 - core index']
  #allocation1 [shape = 'u32[72,128]{1,0:T(1,128)}', space=vmem, size = 0x9000, scoped, tag = 'internal scratch']
  %s0 = inlined_call_operand.vmem [shape: s32[8,1], index: 0, kind: input, shape index: {}]
  %s1 = inlined_call_operand.hbm [shape: f32[128,384], index: 1, kind: input, shape index: {}]
  %s2 = inlined_call_operand.hbm [shape: f32[128,512], index: 2, kind: input, shape index: {}]
  %s3 = inlined_call_operand.vmem [shape: f32[8,128], index: 3, kind: input, shape index: {}]
  %s4 = inlined_call_operand.vmem [shape: f32[8,256], index: 4, kind: output, shape index: {}]
  %s5 = sld [smem:[#allocation0]]
  $region34: #{char_rnn1_forward.1} parent=0
    _
  %s7 = ssub.s32 1, %s5
  %s8 = scalar_select 0, %s7, %s5
  $region1: #{char_rnn1_forward.1} parent=0
    #allocation2 [shape = 'u8[196608]{0}', space=vmem, size = 0x30000, scoped, tag = 'input window, operand 1, single buffered']
    #allocation3 [shape = 's32[1]{0}', space=sflag, size = 0x4, scoped, tag = 'scoped memory for char_rnn1_forward.1']
    #allocation4 [shape = 'u8[262144]{0}', space=vmem, size = 0x40000, scoped, tag = 'input window, operand 2, single buffered']
    #allocation5 [shape = 's32[1]{0}', space=sflag, size = 0x4, scoped, tag = 'scoped memory for char_rnn1_forward.1']
    %9 = vsyncpa [#allocation3], 0
    %10 = vsyncpa [#allocation5], 0
    // Predicated region
    $region2: #{char_rnn1_forward.1} parent=1 // pred_check
      _
    $region3: #{char_rnn1_forward.1} parent=1 // pred_check_branch
      %12 = sbr.rel (0) target = $region5
    $region4: #{char_rnn1_forward.1} parent=1 // pred_region
      _
    $region5: #{char_rnn1_forward.1} parent=1 // pred_fallthru
      _
    // Predicated region
    $region6: #{char_rnn1_forward.1} parent=1 // pred_check
      _
    $region7: #{char_rnn1_forward.1} parent=1 // pred_check_branch
      %14 = sbr.rel (0) target = $region9
    $region8: #{char_rnn1_forward.1} parent=1 // pred_region
      %16 = vsyncadd [#allocation3], 0
      %s17 = sshll.u32 %s1, 4
      %s18 = int_to_ptr.hbm [resolvable:$true] %s17
      %s19 = sshll.u32 [#allocation2], 4
      %s20 = int_to_ptr.vmem [resolvable:$true] %s19
      %25 = dma.hbm_to_vmem [thread:$0]  %s18, 6144, %s20, [#allocation3], 384, 384, 24
    $region9: #{char_rnn1_forward.1} parent=1 // pred_fallthru
      _
    // Predicated region
    $region10: #{char_rnn1_forward.1} parent=1 // pred_check
      _
    $region11: #{char_rnn1_forward.1} parent=1 // pred_check_branch
      %27 = sbr.rel (0) target = $region13
    $region12: #{char_rnn1_forward.1} parent=1 // pred_region
      %29 = vsyncadd [#allocation5], 0
      %s30 = sshll.u32 %s2, 4
      %s31 = int_to_ptr.hbm [resolvable:$true] %s30
      %s32 = sshll.u32 [#allocation4], 4
      %s33 = int_to_ptr.vmem [resolvable:$true] %s32
      %38 = dma.hbm_to_vmem [thread:$0]  %s31, 8192, %s33, [#allocation5], 512, 512, 32
    $region13: #{char_rnn1_forward.1} parent=1 // pred_fallthru
      _
    // Predicated region
    $region14: #{char_rnn1_forward.1} parent=1 // pred_check
      _
    $region15: #{char_rnn1_forward.1} parent=1 // pred_check_branch
      %40 = sbr.rel (0) target = $region17
    $region16: #{char_rnn1_forward.1} parent=1 // pred_region
      _
    $region17: #{char_rnn1_forward.1} parent=1 // pred_fallthru
      _
    // Predicated region
    $region18: #{char_rnn1_forward.1} parent=1 // pred_check
      _
    $region19: #{char_rnn1_forward.1} parent=1 // pred_check_branch
      %42 = sbr.rel (0) target = $region21
    $region20: #{char_rnn1_forward.1} parent=1 // pred_region
      %44 = dma.done [#allocation3], 6144
    $region21: #{char_rnn1_forward.1} parent=1 // pred_fallthru
      _
    // Predicated region
    $region22: #{char_rnn1_forward.1} parent=1 // pred_check
      _
    $region23: #{char_rnn1_forward.1} parent=1 // pred_check_branch
      %46 = sbr.rel (0) target = $region25
    $region24: #{char_rnn1_forward.1} parent=1 // pred_region
      %48 = dma.done [#allocation5], 8192
    $region25: #{char_rnn1_forward.1} parent=1 // pred_fallthru
      _
    %v49 = vld [vmem:[%s0] sm:$0xff]
    %v50 = vlaneseq
    %v51 = vand.u32 %v50, 127
    %52 = vset.pattern.permute.xlu0 0
    %53 = vperm.xlu0 %52, %v49
    %v54 = vpop.permute.xlu0 %53
    %vm55 = vcmp.eq.s32.totalorder %v51, %v54
    %v56 = vsel %vm55, 1, 0
    %v57 = vcvt.s32.f32 %v56
    %v58 = vld [vmem:[#allocation2] sm:$0xff]
    %v59 = vld [vmem:[#allocation2 + $0x8] sm:$0xff]
    %v60 = vld [vmem:[#allocation2 + $0x10] sm:$0xff]
    %v61 = vld [vmem:[#allocation2 + $0x18] sm:$0xff]
    %v62 = vld [vmem:[#allocation2 + $0x20] sm:$0xff]
    %v63 = vld [vmem:[#allocation2 + $0x28] sm:$0xff]
    %v64 = vld [vmem:[#allocation2 + $0x30] sm:$0xff]
    %v65 = vld [vmem:[#allocation2 + $0x38] sm:$0xff]
    %v66 = vld [vmem:[#allocation2 + $0x40] sm:$0xff]
    %v67 = vld [vmem:[#allocation2 + $0x48] sm:$0xff]
    %v68 = vld [vmem:[#allocation2 + $0x50] sm:$0xff]
    %v69 = vld [vmem:[#allocation2 + $0x58] sm:$0xff]
    %v70 = vld [vmem:[#allocation2 + $0x60] sm:$0xff]
    %v71 = vld [vmem:[#allocation2 + $0x68] sm:$0xff]
    %v72 = vld [vmem:[#allocation2 + $0x70] sm:$0xff]
    %v73 = vld [vmem:[#allocation2 + $0x78] sm:$0xff]
    %v74 = vld [vmem:[#allocation2 + $0x80] sm:$0xff]
    %v75 = vld [vmem:[#allocation2 + $0x88] sm:$0xff]
    %v76 = vld [vmem:[#allocation2 + $0x90] sm:$0xff]
    %v77 = vld [vmem:[#allocation2 + $0x98] sm:$0xff]
    %v78 = vld [vmem:[#allocation2 + $0xa0] sm:$0xff]
    %v79 = vld [vmem:[#allocation2 + $0xa8] sm:$0xff]
    %v80 = vld [vmem:[#allocation2 + $0xb0] sm:$0xff]
    %v81 = vld [vmem:[#allocation2 + $0xb8] sm:$0xff]
    %v82 = vld [vmem:[#allocation2 + $0xc0] sm:$0xff]
    %v83 = vld [vmem:[#allocation2 + $0xc8] sm:$0xff]
    %v84 = vld [vmem:[#allocation2 + $0xd0] sm:$0xff]
    %v85 = vld [vmem:[#allocation2 + $0xd8] sm:$0xff]
    %v86 = vld [vmem:[#allocation2 + $0xe0] sm:$0xff]
    %v87 = vld [vmem:[#allocation2 + $0xe8] sm:$0xff]
    %v88 = vld [vmem:[#allocation2 + $0xf0] sm:$0xff]
    %v89 = vld [vmem:[#allocation2 + $0xf8] sm:$0xff]
    %v90 = vld [vmem:[#allocation2 + $0x100] sm:$0xff]
    %v91 = vld [vmem:[#allocation2 + $0x108] sm:$0xff]
    %v92 = vld [vmem:[#allocation2 + $0x110] sm:$0xff]
    %v93 = vld [vmem:[#allocation2 + $0x118] sm:$0xff]
    %v94 = vld [vmem:[#allocation2 + $0x120] sm:$0xff]
    %v95 = vld [vmem:[#allocation2 + $0x128] sm:$0xff]
    %v96 = vld [vmem:[#allocation2 + $0x130] sm:$0xff]
    %v97 = vld [vmem:[#allocation2 + $0x138] sm:$0xff]
    %v98 = vld [vmem:[#allocation2 + $0x140] sm:$0xff]
    %v99 = vld [vmem:[#allocation2 + $0x148] sm:$0xff]
    %v100 = vld [vmem:[#allocation2 + $0x150] sm:$0xff]
    %v101 = vld [vmem:[#allocation2 + $0x158] sm:$0xff]
    %v102 = vld [vmem:[#allocation2 + $0x160] sm:$0xff]
    %v103 = vld [vmem:[#allocation2 + $0x168] sm:$0xff]
    %v104 = vld [vmem:[#allocation2 + $0x170] sm:$0xff]
    %v105 = vld [vmem:[#allocation2 + $0x178] sm:$0xff]
    %106 = vmatpush.msra.mxu0 %v103
    %107 = vmatpush.msra.mxu0 %v100
    %108 = vmatpush.msra.mxu0 %v97
    %109 = vmatpush.msra.mxu0 %v94
    %110 = vmatpush.msra.mxu0 %v91
    %111 = vmatpush.msra.mxu0 %v88
    %112 = vmatpush.msra.mxu0 %v85
    %113 = vmatpush.msra.mxu0 %v82
    %114 = vmatpush.msra.mxu0 %v79
    %115 = vmatpush.msra.mxu0 %v76
    %116 = vmatpush.msra.mxu0 %v73
    %117 = vmatpush.msra.mxu0 %v70
    %118 = vmatpush.msra.mxu0 %v67
    %119 = vmatpush.msra.mxu0 %v64
    %120 = vmatpush.msra.mxu0 %v61
    %121 = vmatpush.msra.mxu0 %v58
    %122 = vmatmul.f32.gmra.mxu0 %v57
    %v123 = vpop.f32.mrf.mxu0
    %v124 = vadd.f32 0.0, %v123
    %125 = vdwg.mxu0
    %126 = vmatpush.msra.mxu0 %v104
    %127 = vmatpush.msra.mxu0 %v101
    %128 = vmatpush.msra.mxu0 %v98
    %129 = vmatpush.msra.mxu0 %v95
    %130 = vmatpush.msra.mxu0 %v92
    %131 = vmatpush.msra.mxu0 %v89
    %132 = vmatpush.msra.mxu0 %v86
    %133 = vmatpush.msra.mxu0 %v83
    %134 = vmatpush.msra.mxu0 %v80
    %135 = vmatpush.msra.mxu0 %v77
    %136 = vmatpush.msra.mxu0 %v74
    %137 = vmatpush.msra.mxu0 %v71
    %138 = vmatpush.msra.mxu0 %v68
    %139 = vmatpush.msra.mxu0 %v65
    %140 = vmatpush.msra.mxu0 %v62
    %141 = vmatpush.msra.mxu0 %v59
    %142 = vmatmul.f32.gmra.mxu0 %v57
    %v143 = vpop.f32.mrf.mxu0
    %v144 = vadd.f32 0.0, %v143
    %145 = vdwg.mxu0
    %146 = vmatpush.msra.mxu0 %v105
    %147 = vmatpush.msra.mxu0 %v102
    %148 = vmatpush.msra.mxu0 %v99
    %149 = vmatpush.msra.mxu0 %v96
    %150 = vmatpush.msra.mxu0 %v93
    %151 = vmatpush.msra.mxu0 %v90
    %152 = vmatpush.msra.mxu0 %v87
    %153 = vmatpush.msra.mxu0 %v84
    %154 = vmatpush.msra.mxu0 %v81
    %155 = vmatpush.msra.mxu0 %v78
    %156 = vmatpush.msra.mxu0 %v75
    %157 = vmatpush.msra.mxu0 %v72
    %158 = vmatpush.msra.mxu0 %v69
    %159 = vmatpush.msra.mxu0 %v66
    %160 = vmatpush.msra.mxu0 %v63
    %161 = vmatpush.msra.mxu0 %v60
    %162 = vmatmul.f32.gmra.mxu0 %v57
    %v163 = vpop.f32.mrf.mxu0
    %v164 = vadd.f32 0.0, %v163
    %165 = vdwg.mxu0
    %v166 = vld [vmem:[%s3] sm:$0xff]
    %v167 = vld [vmem:[#allocation4] sm:$0xff]
    %v168 = vld [vmem:[#allocation4 + $0x8] sm:$0xff]
    %v169 = vld [vmem:[#allocation4 + $0x10] sm:$0xff]
    %v170 = vld [vmem:[#allocation4 + $0x18] sm:$0xff]
    %v171 = vld [vmem:[#allocation4 + $0x20] sm:$0xff]
    %v172 = vld [vmem:[#allocation4 + $0x28] sm:$0xff]
    %v173 = vld [vmem:[#allocation4 + $0x30] sm:$0xff]
    %v174 = vld [vmem:[#allocation4 + $0x38] sm:$0xff]
    %v175 = vld [vmem:[#allocation4 + $0x40] sm:$0xff]
    %v176 = vld [vmem:[#allocation4 + $0x48] sm:$0xff]
    %v177 = vld [vmem:[#allocation4 + $0x50] sm:$0xff]
    %v178 = vld [vmem:[#allocation4 + $0x58] sm:$0xff]
    %v179 = vld [vmem:[#allocation4 + $0x60] sm:$0xff]
    %v180 = vld [vmem:[#allocation4 + $0x68] sm:$0xff]
    %v181 = vld [vmem:[#allocation4 + $0x70] sm:$0xff]
    %v182 = vld [vmem:[#allocation4 + $0x78] sm:$0xff]
    %v183 = vld [vmem:[#allocation4 + $0x80] sm:$0xff]
    %v184 = vld [vmem:[#allocation4 + $0x88] sm:$0xff]
    %v185 = vld [vmem:[#allocation4 + $0x90] sm:$0xff]
    %v186 = vld [vmem:[#allocation4 + $0x98] sm:$0xff]
    %v187 = vld [vmem:[#allocation4 + $0xa0] sm:$0xff]
    %v188 = vld [vmem:[#allocation4 + $0xa8] sm:$0xff]
    %v189 = vld [vmem:[#allocation4 + $0xb0] sm:$0xff]
    %v190 = vld [vmem:[#allocation4 + $0xb8] sm:$0xff]
    %v191 = vld [vmem:[#allocation4 + $0xc0] sm:$0xff]
    %v192 = vld [vmem:[#allocation4 + $0xc8] sm:$0xff]
    %v193 = vld [vmem:[#allocation4 + $0xd0] sm:$0xff]
    %v194 = vld [vmem:[#allocation4 + $0xd8] sm:$0xff]
    %v195 = vld [vmem:[#allocation4 + $0xe0] sm:$0xff]
    %v196 = vld [vmem:[#allocation4 + $0xe8] sm:$0xff]
    %v197 = vld [vmem:[#allocation4 + $0xf0] sm:$0xff]
    %v198 = vld [vmem:[#allocation4 + $0xf8] sm:$0xff]
    %v199 = vld [vmem:[#allocation4 + $0x100] sm:$0xff]
    %v200 = vld [vmem:[#allocation4 + $0x108] sm:$0xff]
    %v201 = vld [vmem:[#allocation4 + $0x110] sm:$0xff]
    %v202 = vld [vmem:[#allocation4 + $0x118] sm:$0xff]
    %v203 = vld [vmem:[#allocation4 + $0x120] sm:$0xff]
    %v204 = vld [vmem:[#allocation4 + $0x128] sm:$0xff]
    %v205 = vld [vmem:[#allocation4 + $0x130] sm:$0xff]
    %v206 = vld [vmem:[#allocation4 + $0x138] sm:$0xff]
    %v207 = vld [vmem:[#allocation4 + $0x140] sm:$0xff]
    %v208 = vld [vmem:[#allocation4 + $0x148] sm:$0xff]
    %v209 = vld [vmem:[#allocation4 + $0x150] sm:$0xff]
    %v210 = vld [vmem:[#allocation4 + $0x158] sm:$0xff]
    %v211 = vld [vmem:[#allocation4 + $0x160] sm:$0xff]
    %v212 = vld [vmem:[#allocation4 + $0x168] sm:$0xff]
    %v213 = vld [vmem:[#allocation4 + $0x170] sm:$0xff]
    %v214 = vld [vmem:[#allocation4 + $0x178] sm:$0xff]
    %v215 = vld [vmem:[#allocation4 + $0x180] sm:$0xff]
    %v216 = vld [vmem:[#allocation4 + $0x188] sm:$0xff]
    %v217 = vld [vmem:[#allocation4 + $0x190] sm:$0xff]
    %v218 = vld [vmem:[#allocation4 + $0x198] sm:$0xff]
    %v219 = vld [vmem:[#allocation4 + $0x1a0] sm:$0xff]
    %v220 = vld [vmem:[#allocation4 + $0x1a8] sm:$0xff]
    %v221 = vld [vmem:[#allocation4 + $0x1b0] sm:$0xff]
    %v222 = vld [vmem:[#allocation4 + $0x1b8] sm:$0xff]
    %v223 = vld [vmem:[#allocation4 + $0x1c0] sm:$0xff]
    %v224 = vld [vmem:[#allocation4 + $0x1c8] sm:$0xff]
    %v225 = vld [vmem:[#allocation4 + $0x1d0] sm:$0xff]
    %v226 = vld [vmem:[#allocation4 + $0x1d8] sm:$0xff]
    %v227 = vld [vmem:[#allocation4 + $0x1e0] sm:$0xff]
    %v228 = vld [vmem:[#allocation4 + $0x1e8] sm:$0xff]
    %v229 = vld [vmem:[#allocation4 + $0x1f0] sm:$0xff]
    %v230 = vld [vmem:[#allocation4 + $0x1f8] sm:$0xff]
    %231 = vmatpush.msra.mxu0 %v227
    %232 = vmatpush.msra.mxu0 %v223
    %233 = vmatpush.msra.mxu0 %v219
    %234 = vmatpush.msra.mxu0 %v215
    %235 = vmatpush.msra.mxu0 %v211
    %236 = vmatpush.msra.mxu0 %v207
    %237 = vmatpush.msra.mxu0 %v203
    %238 = vmatpush.msra.mxu0 %v199
    %239 = vmatpush.msra.mxu0 %v195
    %240 = vmatpush.msra.mxu0 %v191
    %241 = vmatpush.msra.mxu0 %v187
    %242 = vmatpush.msra.mxu0 %v183
    %243 = vmatpush.msra.mxu0 %v179
    %244 = vmatpush.msra.mxu0 %v175
    %245 = vmatpush.msra.mxu0 %v171
    %246 = vmatpush.msra.mxu0 %v167
    %247 = vmatmul.f32.gmra.mxu0 %v166
    %v248 = vpop.f32.mrf.mxu0
    %v249 = vadd.f32 0.0, %v248
    %250 = vdwg.mxu0
    %251 = vmatpush.msra.mxu0 %v228
    %252 = vmatpush.msra.mxu0 %v224
    %253 = vmatpush.msra.mxu0 %v220
    %254 = vmatpush.msra.mxu0 %v216
    %255 = vmatpush.msra.mxu0 %v212
    %256 = vmatpush.msra.mxu0 %v208
    %257 = vmatpush.msra.mxu0 %v204
    %258 = vmatpush.msra.mxu0 %v200
    %259 = vmatpush.msra.mxu0 %v196
    %260 = vmatpush.msra.mxu0 %v192
    %261 = vmatpush.msra.mxu0 %v188
    %262 = vmatpush.msra.mxu0 %v184
    %263 = vmatpush.msra.mxu0 %v180
    %264 = vmatpush.msra.mxu0 %v176
    %265 = vmatpush.msra.mxu0 %v172
    %266 = vmatpush.msra.mxu0 %v168
    %267 = vmatmul.f32.gmra.mxu0 %v166
    %v268 = vpop.f32.mrf.mxu0
    %v269 = vadd.f32 0.0, %v268
    %270 = vdwg.mxu0
    %271 = vmatpush.msra.mxu0 %v229
    %272 = vmatpush.msra.mxu0 %v225
    %273 = vmatpush.msra.mxu0 %v221
    %274 = vmatpush.msra.mxu0 %v217
    %275 = vmatpush.msra.mxu0 %v213
    %276 = vmatpush.msra.mxu0 %v209
    %277 = vmatpush.msra.mxu0 %v205
    %278 = vmatpush.msra.mxu0 %v201
    %279 = vmatpush.msra.mxu0 %v197
    %280 = vmatpush.msra.mxu0 %v193
    %281 = vmatpush.msra.mxu0 %v189
    %282 = vmatpush.msra.mxu0 %v185
    %283 = vmatpush.msra.mxu0 %v181
    %284 = vmatpush.msra.mxu0 %v177
    %285 = vmatpush.msra.mxu0 %v173
    %286 = vmatpush.msra.mxu0 %v169
    %287 = vmatmul.f32.gmra.mxu0 %v166
    %v288 = vpop.f32.mrf.mxu0
    %v289 = vadd.f32 0.0, %v288
    %290 = vdwg.mxu0
    %291 = vmatpush.msra.mxu0 %v230
    %292 = vmatpush.msra.mxu0 %v226
    %293 = vmatpush.msra.mxu0 %v222
    %294 = vmatpush.msra.mxu0 %v218
    %295 = vmatpush.msra.mxu0 %v214
    %296 = vmatpush.msra.mxu0 %v210
    %297 = vmatpush.msra.mxu0 %v206
    %298 = vmatpush.msra.mxu0 %v202
    %299 = vmatpush.msra.mxu0 %v198
    %300 = vmatpush.msra.mxu0 %v194
    %301 = vmatpush.msra.mxu0 %v190
    %302 = vmatpush.msra.mxu0 %v186
    %303 = vmatpush.msra.mxu0 %v182
    %304 = vmatpush.msra.mxu0 %v178
    %305 = vmatpush.msra.mxu0 %v174
    %306 = vmatpush.msra.mxu0 %v170
    %307 = vmatmul.f32.gmra.mxu0 %v166
    %v308 = vpop.f32.mrf.mxu0
    %v309 = vadd.f32 0.0, %v308
    %310 = vdwg.mxu0
    %v311 = vadd.f32 %v124, %v249
    %v312 = vxor.u32 %v311, 2147483648
    %v313 = vmul.f32 %v312, 1.442695
    %v314 = vpow.pop %v313
    %v315 = vadd.f32 %v314, 1.0
    %v316 = vrcp.pop %v315
    %v317 = vmul.f32 %v315, %v316
    %v318 = vsub.f32 1.0, %v317
    %v319 = vmul.f32 %v316, %v318
    %v320 = vadd.f32 %v316, %v319
    %vm321 = vweird.f32 %v315
    %vm322 = vweird.f32 %v316
    %vm323 = vmor %vm321, %vm322
    %v324 = vsel %vm323, %v316, %v320
    %v325 = vand.u32 2147483647, %v315
    %vm326 = vcmp.eq.f32.partialorder %v325, 8.507059e+37
    %v327 = vand.u32 %v315, 2147483648
    %v328 = vor.u32 1.1754944e-38, %v327
    %v329 = vsel %vm326, %v328, %v324
    %v330 = vmul.f32 1.0, %v329
    %v331 = vadd.f32 %v144, %v269
    %v332 = vxor.u32 %v331, 2147483648
    %v333 = vmul.f32 %v332, 1.442695
    %v334 = vpow.pop %v333
    %v335 = vadd.f32 %v334, 1.0
    %v336 = vrcp.pop %v335
    %v337 = vmul.f32 %v335, %v336
    %v338 = vsub.f32 1.0, %v337
    %v339 = vmul.f32 %v336, %v338
    %v340 = vadd.f32 %v336, %v339
    %vm341 = vweird.f32 %v335
    %vm342 = vweird.f32 %v336
    %vm343 = vmor %vm341, %vm342
    %v344 = vsel %vm343, %v336, %v340
    %v345 = vand.u32 2147483647, %v335
    %vm346 = vcmp.eq.f32.partialorder %v345, 8.507059e+37
    %v347 = vand.u32 %v335, 2147483648
    %v348 = vor.u32 1.1754944e-38, %v347
    %v349 = vsel %vm346, %v348, %v344
    %v350 = vmul.f32 1.0, %v349
    %v351 = vmul.f32 %v330, %v289
    %v352 = vadd.f32 %v164, %v351
    %v353 = vtanh.pop %v352
    %v354 = vsub.f32 1.0, %v350
    %v355 = vmul.f32 %v354, %v353
    %v356 = vmul.f32 %v350, %v166
    %v357 = vadd.f32 %v355, %v356
    %358 = vst [vmem:[%s4] sm:$0xff] %v357
    %359 = vst [vmem:[%s4 + $0x8] sm:$0xff] %v309
    // Predicated region
    $region26: #{char_rnn1_forward.1} parent=1 // pred_check
      _
    $region27: #{char_rnn1_forward.1} parent=1 // pred_check_branch
      %361 = sbr.rel (0) target = $region29
    $region28: #{char_rnn1_forward.1} parent=1 // pred_region
      _
    $region29: #{char_rnn1_forward.1} parent=1 // pred_fallthru
      _
    // Predicated region
    $region30: #{char_rnn1_forward.1} parent=1 // pred_check
      _
    $region31: #{char_rnn1_forward.1} parent=1 // pred_check_branch
      %363 = sbr.rel (0) target = $region33
    $region32: #{char_rnn1_forward.1} parent=1 // pred_region
      _
    $region33: #{char_rnn1_forward.1} parent=1 // pred_fallthru
      _
    %364 = vsyncpa [#allocation3], 1
    %365 = vsyncpa [#allocation5], 1

</llo_original>
